<compile_context>
chip_gen: v5e
topology: v5e:2x2
jax: 0.10.0
libtpu: 0.0.40
codegen_flags: <defaults>
</compile_context>

<pallas_src>
import functools

import numpy as np
import jax
import jax.numpy as jnp
from jax.experimental import pallas as pl
from jax.experimental.pallas import tpu as pltpu


def _round_up(x, m):
    return (x + m - 1) // m * m


# ----------------------------- Pallas kernel --------------------------------
def _make_encoder_kernel(num_layers, hp):
    """hp = lane-padded hidden size (multiple of 64 -> 2*hp multiple of 128)."""

    def kernel(token_ref, embed_ref, w_ref, b_ref, out_ref, x_scratch):
        # token_ref is consumed by the embedding BlockSpec index_map (row gather
        # fused into the input DMA via scalar prefetch).
        del token_ref
        layer = pl.program_id(0)

        # Layer 0: seed the carried activation with the gathered embedding row.
        @pl.when(layer == 0)
        def _():
            x_scratch[...] = embed_ref[0].astype(jnp.float32)

        x = x_scratch[...]                                       # (1, in_dim_pad) f32

        # Single MXU push for both directions; f32 accumulation.
        gates = jnp.dot(x.astype(w_ref.dtype), w_ref[0],
                        preferred_element_type=jnp.float32) + b_ref[0]   # (1, 6*hp)

        # Lane-aligned column layout (each block hp wide):
        #   [ i_fwd | i_rev | o_fwd | o_rev | g_fwd | g_rev ]
        sig = jax.nn.sigmoid(gates[:, : 4 * hp])                 # i_*, o_*
        g = jnp.tanh(gates[:, 4 * hp:])                          # g_*

        # h0 == 0 and c0 == 0 (initHidden) and seq_len == 1, so exactly:
        #   c = i * g ,  h = o * tanh(c)
        # (forget gate and h@W_hh contribute nothing and were dropped from the
        # packed weights).
        # TODO(synk): if generalized to seq_len > 1 / nonzero state, restore the
        # forget gate + W_hh recurrence and carry (h, c) over a time grid axis.
        h = sig[:, 2 * hp: 4 * hp] * jnp.tanh(sig[:, : 2 * hp] * g)   # (1, 2*hp)

        @pl.when(layer < num_layers - 1)
        def _():
            # Carry to the next layer.  Any scratch columns beyond 2*hp keep
            # stale values, but the matching weight rows are zero-padded.
            x_scratch[:, : 2 * hp] = h

        @pl.when(layer == num_layers - 1)
        def _():
            out_ref[...] = h      # lane-dense (1, 2*hp) unmasked store

    return kernel


# ----------------------------- Wrapper ---------------------------------------
@functools.partial(jax.jit, static_argnums=(4,))
def encoder_bilstm_forward(token, embed_padded, w_stack, b_stack, hidden_size):
    """EncoderBILSTM.forward for one token.

    Preconditions (exactly what the PyTorch module does): zero initial (h0, c0)
    from initHidden(), seq_len == 1, batch == 1, dropout inactive. The packed
    weights drop the forget-gate and W_hh terms, which is exact only under
    these preconditions.
    """
    num_layers, in_dim_pad, G = w_stack.shape
    hp = G // 6
    H = hidden_size

    token_arr = jnp.asarray(token, jnp.int32).reshape(1)

    grid_spec = pltpu.PrefetchScalarGridSpec(
        num_scalar_prefetch=1,
        grid=(num_layers,),
        in_specs=[
            # Embedding row gather fused into the input DMA (scalar prefetch);
            # same block index every layer -> fetched once.
            pl.BlockSpec((1, 1, in_dim_pad), lambda l, tok: (tok[0], 0, 0)),
            # Per-layer weight/bias streamed over the layer grid axis ->
            # automatic double buffering (only ~2 layers resident in VMEM,
            # layer l+1 DMA overlaps layer l compute).
            pl.BlockSpec((1, in_dim_pad, G), lambda l, tok: (l, 0, 0)),
            pl.BlockSpec((1, 1, G), lambda l, tok: (l, 0, 0)),
        ],
        out_specs=pl.BlockSpec((1, 2 * hp), lambda l, tok: (0, 0)),
        scratch_shapes=[pltpu.VMEM((1, in_dim_pad), jnp.float32)],
    )

    # VMEM budget: double-buffered per-layer weight+bias + embed row + misc.
    itemsize = w_stack.dtype.itemsize
    per_layer_bytes = in_dim_pad * G * itemsize + G * 4
    need = (2 * per_layer_bytes + 2 * in_dim_pad * 4
            + 2 * hp * 4 + in_dim_pad * 4 + (2 << 20))
    # NOTE: for very large H keep this below v7x's 64 MiB physical VMEM.
    vmem_limit = int(min(max(need, 32 * 2 ** 20), 56 * 2 ** 20))

    cost = pl.CostEstimate(
        flops=2 * num_layers * in_dim_pad * G,
        transcendentals=num_layers * 8 * hp,
        bytes_accessed=(w_stack.size * itemsize + b_stack.size * 4
                        + in_dim_pad * 4 + 2 * hp * 4),
    )

    out = pl.pallas_call(
        _make_encoder_kernel(num_layers, hp),
        out_shape=jax.ShapeDtypeStruct((1, 2 * hp), jnp.float32),
        grid_spec=grid_spec,
        compiler_params=pltpu.CompilerParams(
            dimension_semantics=("arbitrary",),   # carried state across layers
            vmem_limit_bytes=vmem_limit,
        ),
        cost_estimate=cost,
    )(token_arr, embed_padded, w_stack, b_stack)

    # Strip lane padding: [h_fwd (H) | 0-pad | h_rev (H) | 0-pad] -> (1, 1, 2H).
    h_fwd = out[:, :H]
    h_rev = out[:, hp:hp + H]
    return jnp.concatenate([h_fwd, h_rev], axis=1).reshape(1, 1, 2 * H)


# ----------------------------- Params -----------------------------------------
def init_params(key, vocab_size, embed_size, hidden_size, num_layers):
    """PyTorch-style params: embedding ~ N(0,1), LSTM weights ~ U(-1/sqrt(H), 1/sqrt(H)),
    gate row order (i, f, g, o)."""
    k = 1.0 / jnp.sqrt(jnp.float32(hidden_size))
    keys = jax.random.split(key, 1 + num_layers * 2 * 4)
    embed_table = jax.random.normal(keys[0], (vocab_size, embed_size), jnp.float32)

    torch_params = {}
    idx = 1
    for layer in range(num_layers):
        in_dim = embed_size if layer == 0 else 2 * hidden_size
        for direction in range(2):  # 0 = forward, 1 = reverse
            w_ih = jax.random.uniform(keys[idx], (4 * hidden_size, in_dim),
                                      jnp.float32, -k, k); idx += 1
            w_hh = jax.random.uniform(keys[idx], (4 * hidden_size, hidden_size),
                                      jnp.float32, -k, k); idx += 1
            b_ih = jax.random.uniform(keys[idx], (4 * hidden_size,),
                                      jnp.float32, -k, k); idx += 1
            b_hh = jax.random.uniform(keys[idx], (4 * hidden_size,),
                                      jnp.float32, -k, k); idx += 1
            torch_params[(layer, direction)] = (w_ih, w_hh, b_ih, b_hh)
    return embed_table, torch_params


def pack_params(torch_params, num_layers, hidden_size, embed_size,
                weight_dtype=jnp.bfloat16):
    """Fuse per-(layer, direction) PyTorch LSTM weights into the kernel layout.

    One stacked weight (L, in_dim_pad, 6*Hp) + bias (L, 1, 6*Hp), columns
      [i_fwd | i_rev | o_fwd | o_rev | g_fwd | g_rev], each block Hp wide
    with real data in its first H lanes and zeros elsewhere (lane alignment).
    Forget-gate columns and W_hh are dropped (exact: h0 == c0 == 0, seq_len == 1);
    b_ih + b_hh combined (exact).  Weights cast to bf16 for the MXU.
    """
    H = hidden_size
    hp = _round_up(H, 64)                              # 2*hp multiple of 128
    in_dim_pad = max(_round_up(embed_size, 128), 2 * hp)
    G = 6 * hp

    w_stack = np.zeros((num_layers, in_dim_pad, G), np.float32)
    b_stack = np.zeros((num_layers, 1, G), np.float32)

    # PyTorch gate rows: i=[0:H], f=[H:2H], g=[2H:3H], o=[3H:4H]; keep i, o, g.
    gate_slices = (slice(0, H), slice(3 * H, 4 * H), slice(2 * H, 3 * H))
    for layer in range(num_layers):
        for gi, gate_sl in enumerate(gate_slices):
            for d in range(2):
                w_ih, _w_hh, b_ih, b_hh = torch_params[(layer, d)]
                w_ih = np.asarray(w_ih)
                bias = np.asarray(b_ih + b_hh)
                col = (2 * gi + d) * hp
                wT = w_ih[gate_sl].T                   # (in_dim, H)
                if layer == 0:
                    w_stack[layer, :embed_size, col:col + H] = wT
                else:
                    # Next-layer input layout: h_fwd at rows [0:H],
                    # h_rev at rows [hp:hp+H]; padded rows stay zero.
                    w_stack[layer, 0:H, col:col + H] = wT[0:H]
                    w_stack[layer, hp:hp + H, col:col + H] = wT[H:2 * H]
                b_stack[layer, 0, col:col + H] = bias[gate_sl]

    return (jnp.asarray(w_stack, weight_dtype),
            jnp.asarray(b_stack, jnp.float32),
            hp, in_dim_pad)


def pad_embedding(embed_table, in_dim_pad):
    """(V, E) -> (V, 1, in_dim_pad) zero-padded, ready for the row-gather BlockSpec."""
    V, E = embed_table.shape
    out = jnp.zeros((V, 1, in_dim_pad), jnp.float32)
    return out.at[:, 0, :E].set(embed_table)


# ----------------------------- Pure-JAX reference ----------------------------
def _reference_forward(token, embed_table, torch_params, num_layers, hidden_size):
    """Full PyTorch LSTM equations (all 4 gates, recurrent term, zero h0/c0),
    original (i, f, g, o) gate order. Matmul operands are bf16-rounded to mirror
    the kernel's bf16 MXU path."""
    def q(a):
        return a.astype(jnp.bfloat16).astype(jnp.float32)

    H = hidden_size
    x = embed_table[token].reshape(1, -1).astype(jnp.float32)
    h0 = jnp.zeros((1, H), jnp.float32)
    c0 = jnp.zeros((1, H), jnp.float32)
    for layer in range(num_layers):
        outs = []
        for direction in range(2):
            w_ih, w_hh, b_ih, b_hh = torch_params[(layer, direction)]
            gates = (q(x) @ q(w_ih.T) + h0 @ w_hh.T
                     + (b_ih + b_hh).reshape(1, -1))
            i_g = jax.nn.sigmoid(gates[:, 0 * H:1 * H])
            f_g = jax.nn.sigmoid(gates[:, 1 * H:2 * H])
            g_g = jnp.tanh(gates[:, 2 * H:3 * H])
            o_g = jax.nn.sigmoid(gates[:, 3 * H:4 * H])
            c = f_g * c0 + i_g * g_g
            outs.append(o_g * jnp.tanh(c))
        x = jnp.concatenate(outs, axis=1)
    return x.reshape(1, 1, 2 * hidden_size)


if __name__ == "__main__":
    VOCAB, EMBED, HIDDEN, NUM_LAYERS = 16, 32, 32, 2

    key = jax.random.PRNGKey(0)
    pkey, tkey = jax.random.split(key)
    embed_table, torch_params = init_params(pkey, VOCAB, EMBED, HIDDEN, NUM_LAYERS)
    w_stack, b_stack, hp, in_dim_pad = pack_params(
        torch_params, NUM_LAYERS, HIDDEN, EMBED)
    embed_padded = pad_embedding(embed_table, in_dim_pad)

    # Single token index (the module's .view(1, 1, -1) implies one token).
    token = jax.random.randint(tkey, (1,), 0, VOCAB)[0]

    out = encoder_bilstm_forward(token, embed_padded, w_stack, b_stack, HIDDEN)
    out = jax.block_until_ready(out)

    ref = _reference_forward(token, embed_table, torch_params, NUM_LAYERS, HIDDEN)
    assert out.shape == (1, 1, 2 * HIDDEN), out.shape
    assert jnp.allclose(out, ref, atol=1e-3, rtol=1e-3), \
        float(jnp.max(jnp.abs(out - ref)))

    print("KERNEL_OK")
</pallas_src>

<mosaic_0001>
module attributes {stable_mosaic.version = 11 : i64} {
  func.func @kernel(%arg0: i32, %arg1: memref<1xi32, #tpu.memory_space<smem>>, %arg2: memref<1x1x128xf32, #tpu.memory_space<vmem>>, %arg3: memref<1x128x384xbf16, #tpu.memory_space<vmem>>, %arg4: memref<1x1x384xf32, #tpu.memory_space<vmem>>, %arg5: memref<1x128xf32, #tpu.memory_space<vmem>>, %arg6: memref<1x128xf32, #tpu.memory_space<vmem>>) attributes {dimension_semantics = [#tpu.dimension_semantics<arbitrary>], iteration_bounds = array<i64: 2>, scalar_prefetch = 1 : i64, scratch_operands = 1 : i64, tpu.core_type = #tpu.core_type<tc>, window_params = [{transform_indices = @transform_0, window_bounds = array<i64: 1, 1, 128>}, {transform_indices = @transform_1, window_bounds = array<i64: 1, 128, 384>}, {transform_indices = @transform_2, window_bounds = array<i64: 1, 1, 384>}, {pipeline_mode = #tpu.pipeline_mode<synchronous>, transform_indices = @transform_3, window_bounds = array<i64: 1, 128>}]} {
    %c0_i32 = arith.constant 0 : i32
    %0 = arith.cmpi eq, %arg0, %c0_i32 : i32
    %1 = arith.extui %0 : i1 to i32
    %c0_i32_0 = arith.constant 0 : i32
    %2 = arith.cmpi ne, %1, %c0_i32_0 : i32
    scf.if %2 {
      %c0_12 = arith.constant 0 : index
      %c0_13 = arith.constant 0 : index
      %c0_14 = arith.constant 0 : index
      %30 = vector.load %arg2[%c0_12, %c0_13, %c0_14] : memref<1x1x128xf32, #tpu.memory_space<vmem>>, vector<1x1x128xf32>
      %31 = vector.shape_cast %30 : vector<1x1x128xf32> to vector<1x128xf32>
      %c0_15 = arith.constant 0 : index
      %c0_16 = arith.constant 0 : index
      %32 = vector.load %arg6[%c0_15, %c0_16] : memref<1x128xf32, #tpu.memory_space<vmem>>, vector<1x128xf32>
      tpu.vector_store %arg6[%c0_15, %c0_16], %31 {strides = array<i32>} : memref<1x128xf32, #tpu.memory_space<vmem>>, vector<1x128xf32>,
    } else {
    }
    %c0 = arith.constant 0 : index
    %c0_1 = arith.constant 0 : index
    %3 = vector.load %arg6[%c0, %c0_1] : memref<1x128xf32, #tpu.memory_space<vmem>>, vector<1x128xf32>
    %4 = arith.truncf %3 : vector<1x128xf32> to vector<1x128xbf16>
    %c0_2 = arith.constant 0 : index
    %c0_3 = arith.constant 0 : index
    %c0_4 = arith.constant 0 : index
    %5 = vector.load %arg3[%c0_2, %c0_3, %c0_4] : memref<1x128x384xbf16, #tpu.memory_space<vmem>>, vector<1x128x384xbf16>
    %6 = vector.shape_cast %5 : vector<1x128x384xbf16> to vector<128x384xbf16>
    %cst = arith.constant dense<0.000000e+00> : vector<1x384xf32>
    %7 = tpu.matmul %4, %6, %cst {dimension_numbers = #tpu.dot_dimension_numbers<[1], [0], [0], [1], [0, 0, 1, 1], [], []>} : vector<1x128xbf16>, vector<128x384xbf16>, vector<1x384xf32> -> vector<1x384xf32>
    %c0_5 = arith.constant 0 : index
    %c0_6 = arith.constant 0 : index
    %c0_7 = arith.constant 0 : index
    %8 = vector.load %arg4[%c0_5, %c0_6, %c0_7] : memref<1x1x384xf32, #tpu.memory_space<vmem>>, vector<1x1x384xf32>
    %9 = vector.shape_cast %8 : vector<1x1x384xf32> to vector<1x384xf32>
    %10 = arith.addf %7, %9 : vector<1x384xf32>
    %11 = vector.extract_strided_slice %10 {offsets = [0, 0], sizes = [1, 256], strides = [1, 1]} : vector<1x384xf32> to vector<1x256xf32>
    %12 = arith.negf %11 : vector<1x256xf32>
    %13 = math.exp %12 : vector<1x256xf32>
    %cst_8 = arith.constant 1.000000e+00 : f32
    %14 = vector.broadcast %cst_8 : f32 to vector<1x256xf32>
    %15 = arith.addf %14, %13 : vector<1x256xf32>
    %16 = arith.divf %14, %15 : vector<1x256xf32>
    %17 = vector.extract_strided_slice %10 {offsets = [0, 256], sizes = [1, 128], strides = [1, 1]} : vector<1x384xf32> to vector<1x128xf32>
    %18 = math.tanh %17 : vector<1x128xf32>
    %19 = vector.extract_strided_slice %16 {offsets = [0, 128], sizes = [1, 128], strides = [1, 1]} : vector<1x256xf32> to vector<1x128xf32>
    %20 = vector.extract_strided_slice %16 {offsets = [0, 0], sizes = [1, 128], strides = [1, 1]} : vector<1x256xf32> to vector<1x128xf32>
    %21 = arith.mulf %20, %18 : vector<1x128xf32>
    %22 = math.tanh %21 : vector<1x128xf32>
    %23 = arith.mulf %19, %22 : vector<1x128xf32>
    %c1_i32 = arith.constant 1 : i32
    %24 = arith.cmpi slt, %arg0, %c1_i32 : i32
    %25 = arith.extui %24 : i1 to i32
    %c0_i32_9 = arith.constant 0 : i32
    %26 = arith.cmpi ne, %25, %c0_i32_9 : i32
    scf.if %26 {
      %c0_12 = arith.constant 0 : index
      %c0_13 = arith.constant 0 : index
      %30 = vector.load %arg6[%c0_12, %c0_13] : memref<1x128xf32, #tpu.memory_space<vmem>>, vector<1x128xf32>
      tpu.vector_store %arg6[%c0_12, %c0_13], %23 {strides = array<i32>} : memref<1x128xf32, #tpu.memory_space<vmem>>, vector<1x128xf32>,
    } else {
    }
    %c1_i32_10 = arith.constant 1 : i32
    %27 = arith.cmpi eq, %arg0, %c1_i32_10 : i32
    %28 = arith.extui %27 : i1 to i32
    %c0_i32_11 = arith.constant 0 : i32
    %29 = arith.cmpi ne, %28, %c0_i32_11 : i32
    scf.if %29 {
      %c0_12 = arith.constant 0 : index
      %c0_13 = arith.constant 0 : index
      %30 = vector.load %arg5[%c0_12, %c0_13] : memref<1x128xf32, #tpu.memory_space<vmem>>, vector<1x128xf32>
      tpu.vector_store %arg5[%c0_12, %c0_13], %23 {strides = array<i32>} : memref<1x128xf32, #tpu.memory_space<vmem>>, vector<1x128xf32>,
    } else {
    }
    return
  }
  func.func @transform_0(%arg0: i32, %arg1: memref<1xi32, #tpu.memory_space<smem>>) -> (i32, i32, i32) {
    %c0 = arith.constant 0 : index
    %0 = memref.load %arg1[%c0] : memref<1xi32, #tpu.memory_space<smem>>
    %c0_i32 = arith.constant 0 : i32
    %c0_i32_0 = arith.constant 0 : i32
    %c0_i32_1 = arith.constant 0 : i32
    return %0, %c0_i32, %c0_i32_0 : i32, i32, i32
  }
  func.func @transform_1(%arg0: i32, %arg1: memref<1xi32, #tpu.memory_space<smem>>) -> (i32, i32, i32) {
    %c0_i32 = arith.constant 0 : i32
    %c0_i32_0 = arith.constant 0 : i32
    %c0_i32_1 = arith.constant 0 : i32
    return %arg0, %c0_i32, %c0_i32_0 : i32, i32, i32
  }
  func.func @transform_2(%arg0: i32, %arg1: memref<1xi32, #tpu.memory_space<smem>>) -> (i32, i32, i32) {
    %c0_i32 = arith.constant 0 : i32
    %c0_i32_0 = arith.constant 0 : i32
    %c0_i32_1 = arith.constant 0 : i32
    return %arg0, %c0_i32, %c0_i32_0 : i32, i32, i32
  }
  func.func @transform_3(%arg0: i32, %arg1: memref<1xi32, #tpu.memory_space<smem>>) -> (i32, i32) {
    %c0_i32 = arith.constant 0 : i32
    %c0_i32_0 = arith.constant 0 : i32
    %c0_i32_1 = arith.constant 0 : i32
    return %c0_i32, %c0_i32_0 : i32, i32
  }
}

</mosaic_0001>

<llo_original>
// kernel: encoder_bilstm_forward.1
$region0: #{encoder_bilstm_forward.1}
  #allocation0 [shape = 'u32[]', space=smem, size = 0x4, offset = 0x4, fixed_abs, tag = 'smem constant byte address 0x4 - core index']
  #allocation1 [shape = 'u32[72,128]{1,0:T(1,128)}', space=vmem, size = 0x9000, scoped, tag = 'internal scratch']
  #allocation2 [shape = 'f32[1,128]{1,0:T(1,128)}', space=vmem, size = 0x200, scoped, tag = 'scratch operand']
  #allocation3 [shape = 's32[1]{0}', space=sflag, size = 0x4, scoped, tag = 'scoped memory for encoder_bilstm_forward.1']
  #allocation4 [shape = 's32[1]{0:T(128)S(6)}', space=smem, size = 0x200, scoped, tag = 'prefetched SMEM operand 0']
  %s0 = inlined_call_operand.<no memory space> [shape: s32[1], index: 0, kind: input, shape index: {}]
  %s1 = inlined_call_operand.hbm [shape: f32[16,1,128], index: 1, kind: input, shape index: {}]
  %s2 = inlined_call_operand.hbm [shape: bf16[2,128,384], index: 2, kind: input, shape index: {}]
  %s3 = inlined_call_operand.hbm [shape: f32[2,1,384], index: 3, kind: input, shape index: {}]
  %s4 = inlined_call_operand.vmem [shape: f32[1,128], index: 4, kind: output, shape index: {}]
  %s5 = sld [smem:[#allocation0]]
  $region69: #{encoder_bilstm_forward.1} parent=0
    _
  %s7 = ssub.s32 1, %s5
  %s8 = scalar_select 0, %s7, %s5
  %9 = sst [smem:[#allocation4]] %s0
  $region1: #{encoder_bilstm_forward.1} parent=0
    #allocation5 [shape = 'u8[512]{0}', space=vmem, size = 0x400, scoped, tag = 'input window, operand 1, single buffered']
    #allocation6 [shape = 's32[2]{0}', space=sflag, size = 0x8, scoped, tag = 'scoped memory for encoder_bilstm_forward.1']
    #allocation7 [shape = 'u8[196608]{0}', space=vmem, size = 0x30000, scoped, tag = 'input window, operand 2']
    #allocation8 [shape = 's32[2]{0}', space=sflag, size = 0x8, scoped, tag = 'scoped memory for encoder_bilstm_forward.1']
    #allocation9 [shape = 'u8[3072]{0}', space=vmem, size = 0xc00, scoped, tag = 'input window, operand 3']
    %10 = vsyncpa [#allocation6], 0
    %11 = vsyncpa [#allocation8], 0
    %s12 = scalar_lea.sflag [#allocation8], 1
    %13 = vsyncpa %s12, 0
    loop: start=0, step=1, limit=4
    $region2: #{encoder_bilstm_forward.1} parent=1 // loop_pre_header
      _
    $region3: #{encoder_bilstm_forward.1} parent=1 // loop_header
      %s15 = sphi 0, %s19
      %p16 = scmp.ge.s32.totalorder %s15, 4
      %s27 = sphi 0, %s29
      %s30 = sphi 0, %s27
      %s31 = sphi 0, %s30
      %s47 = sphi 0, %s31
      %s53 = sphi 0, %s55
      %s56 = sphi 0, %s53
      %s57 = sphi 0, %s56
      %s73 = sphi 0, %s57
      %s79 = sphi 0, %s81
      %s82 = sphi 0, %s79
      %s83 = sphi 0, %s82
      %s99 = sphi 0, %s83
      %s103 = sphi 0, %s103
      %s105 = sphi 0, %s103
      %s106 = sphi 0, %s105
      %s120 = sphi 0, %s106
    $region4: #{encoder_bilstm_forward.1} parent=1 // loop_header_branch
      %18 = sbr.rel (%p16) target = $region8
    $region5: #{encoder_bilstm_forward.1} parent=1 // loop_body
      %s20 = ssub.s32 %s15, 1
      %s21 = ssub.s32 %s15, 2
      %s22 = sadd.s32 %s15, 1
      %s23 = sld [smem:[#allocation4]]
      %s24 = sld [smem:[#allocation4]]
      %s25 = ssub.s32 %s23, %s24
      %p26 = scmp.eq.s32.totalorder %s25, 0
      %s28 = sadd.s32 %s27, 1
      %s29 = scalar_select %p26, %s27, %s28
      %p32 = pneg %p26
      %p33 = scmp.eq.s32.totalorder %s15, 1
      %p34 = por %p32, %p33
      %p35 = scmp.ne.s32.totalorder %s27, %s30
      %p36 = scmp.eq.s32.totalorder %s15, 0
      %p37 = por %p35, %p36
      %p38 = scmp.ne.s32.totalorder %s27, %s30
      %p39 = scmp.eq.s32.totalorder %s20, 1
      %p40 = por %p38, %p39
      %p41 = scmp.ne.s32.totalorder %s30, %s31
      %p42 = scmp.eq.s32.totalorder %s20, 0
      %p43 = por %p41, %p42
      %p44 = scmp.ne.s32.totalorder %s30, %s31
      %p45 = scmp.eq.s32.totalorder %s21, 1
      %p46 = por %p44, %p45
      %p48 = scmp.ne.s32.totalorder %s31, %s47
      %p49 = scmp.eq.s32.totalorder %s21, 0
      %p50 = por %p48, %p49
      %s51 = ssub.s32 %s15, %s22
      %p52 = scmp.eq.s32.totalorder %s51, 0
      %s54 = sadd.s32 %s53, 1
      %s55 = scalar_select %p52, %s53, %s54
      %p58 = pneg %p52
      %p59 = scmp.eq.s32.totalorder %s15, 1
      %p60 = por %p58, %p59
      %p61 = scmp.ne.s32.totalorder %s53, %s56
      %p62 = scmp.eq.s32.totalorder %s15, 0
      %p63 = por %p61, %p62
      %p64 = scmp.ne.s32.totalorder %s53, %s56
      %p65 = scmp.eq.s32.totalorder %s20, 1
      %p66 = por %p64, %p65
      %p67 = scmp.ne.s32.totalorder %s56, %s57
      %p68 = scmp.eq.s32.totalorder %s20, 0
      %p69 = por %p67, %p68
      %p70 = scmp.ne.s32.totalorder %s56, %s57
      %p71 = scmp.eq.s32.totalorder %s21, 1
      %p72 = por %p70, %p71
      %p74 = scmp.ne.s32.totalorder %s57, %s73
      %p75 = scmp.eq.s32.totalorder %s21, 0
      %p76 = por %p74, %p75
      %s77 = ssub.s32 %s15, %s22
      %p78 = scmp.eq.s32.totalorder %s77, 0
      %s80 = sadd.s32 %s79, 1
      %s81 = scalar_select %p78, %s79, %s80
      %p84 = pneg %p78
      %p85 = scmp.eq.s32.totalorder %s15, 1
      %p86 = por %p84, %p85
      %p87 = scmp.ne.s32.totalorder %s79, %s82
      %p88 = scmp.eq.s32.totalorder %s15, 0
      %p89 = por %p87, %p88
      %p90 = scmp.ne.s32.totalorder %s79, %s82
      %p91 = scmp.eq.s32.totalorder %s20, 1
      %p92 = por %p90, %p91
      %p93 = scmp.ne.s32.totalorder %s82, %s83
      %p94 = scmp.eq.s32.totalorder %s20, 0
      %p95 = por %p93, %p94
      %p96 = scmp.ne.s32.totalorder %s82, %s83
      %p97 = scmp.eq.s32.totalorder %s21, 1
      %p98 = por %p96, %p97
      %p100 = scmp.ne.s32.totalorder %s83, %s99
      %p101 = scmp.eq.s32.totalorder %s21, 0
      %p102 = por %p100, %p101
      %s104 = sadd.s32 %s103, 1
      %p107 = scmp.eq.s32.totalorder %s15, 1
      %p108 = scmp.ne.s32.totalorder %s103, %s105
      %p109 = scmp.eq.s32.totalorder %s15, 0
      %p110 = por %p108, %p109
      %p111 = scmp.ne.s32.totalorder %s103, %s105
      %p112 = scmp.eq.s32.totalorder %s20, 1
      %p113 = por %p111, %p112
      %p114 = scmp.ne.s32.totalorder %s105, %s106
      %p115 = scmp.eq.s32.totalorder %s20, 0
      %p116 = por %p114, %p115
      %p117 = scmp.ne.s32.totalorder %s105, %s106
      %p118 = scmp.eq.s32.totalorder %s21, 1
      %p119 = por %p117, %p118
      %p121 = scmp.ne.s32.totalorder %s106, %s120
      %p122 = scmp.eq.s32.totalorder %s21, 0
      %p123 = por %p121, %p122
      %p124 = scmp.le.s32.totalorder 1, %s15
      %p125 = scmp.lt.s32.totalorder %s15, 3
      %p126 = pnand %p124, %p125
      %p127 = pneg %p126
      // Predicated region
      $region9: #{encoder_bilstm_forward.1} parent=5 // pred_check
        _
      $region10: #{encoder_bilstm_forward.1} parent=5 // pred_check_branch
        %129 = sbr.rel (%p126) target = $region12
      $region11: #{encoder_bilstm_forward.1} parent=5 // pred_region
        %s130 = ssub.s32 %s15, 1
        // Predicated region
        $region13: #{encoder_bilstm_forward.1} parent=11 // pred_check
          %p131 = pneg %p43
        $region14: #{encoder_bilstm_forward.1} parent=11 // pred_check_branch
          %133 = sbr.rel (%p131) target = $region16
        $region15: #{encoder_bilstm_forward.1} parent=11 // pred_region
          %s134 = sld [smem:[#allocation4]]
          %136 = vsyncadd [#allocation6], 0
          %s137 = scalar_lea.hbm %s1, %s134
          %s139 = sshll.u32 %s137, 4
          %s140 = int_to_ptr.hbm [resolvable:$true] %s139
          %s141 = sshll.u32 [#allocation5], 4
          %s142 = int_to_ptr.vmem [resolvable:$true] %s141
          %144 = dma.hbm_to_vmem [thread:$0]  %s140, 16, %s142, [#allocation6]
        $region16: #{encoder_bilstm_forward.1} parent=11 // pred_fallthru
          _
      $region12: #{encoder_bilstm_forward.1} parent=5 // pred_fallthru
        _
      %p145 = scmp.lt.s32.totalorder %s15, 2
      // Predicated region
      $region17: #{encoder_bilstm_forward.1} parent=5 // pred_check
        %p146 = pneg %p145
      $region18: #{encoder_bilstm_forward.1} parent=5 // pred_check_branch
        %148 = sbr.rel (%p146) target = $region20
      $region19: #{encoder_bilstm_forward.1} parent=5 // pred_region
        // Predicated region
        $region21: #{encoder_bilstm_forward.1} parent=19 // pred_check
          %p149 = pneg %p63
        $region22: #{encoder_bilstm_forward.1} parent=19 // pred_check_branch
          %151 = sbr.rel (%p149) target = $region24
        $region23: #{encoder_bilstm_forward.1} parent=19 // pred_region
          %s152 = sand.u32 %s15, 1
          %s153 = scalar_lea.sflag [#allocation8], %s152
          %s154 = sand.u32 %s53, 1
          %s155 = smul.addr %s154, 192
          %s156 = scalar_lea.vmem [#allocation7], %s155
          %158 = vsyncadd %s153, 0
          %s159 = smul.addr %s15, 48
          %s160 = smul.addr %s159, 4
          %s161 = scalar_lea.hbm %s2, %s160
          %s162 = sshll.u32 %s161, 4
          %s163 = int_to_ptr.hbm [resolvable:$true] %s162
          %s164 = sshll.u32 %s156, 4
          %s165 = int_to_ptr.vmem [resolvable:$true] %s164
          %170 = dma.hbm_to_vmem [thread:$0]  %s163, 3072, %s165, %s153, 192, 192, 12
        $region24: #{encoder_bilstm_forward.1} parent=19 // pred_fallthru
          _
        // Predicated region
        $region25: #{encoder_bilstm_forward.1} parent=19 // pred_check
          %p171 = pneg %p89
        $region26: #{encoder_bilstm_forward.1} parent=19 // pred_check_branch
          %173 = sbr.rel (%p171) target = $region28
        $region27: #{encoder_bilstm_forward.1} parent=19 // pred_region
          %s174 = sand.u32 %s15, 1
          %s175 = scalar_lea.sflag [#allocation8], %s174
          %s176 = sand.u32 %s79, 1
          %s177 = smul.addr %s176, 3
          %s178 = scalar_lea.vmem [#allocation9], %s177
          %180 = vsyncadd %s175, 0
          %s181 = smul.addr %s15, 3
          %s182 = scalar_lea.hbm %s3, %s181
          %s184 = sshll.u32 %s182, 4
          %s185 = int_to_ptr.hbm [resolvable:$true] %s184
          %s186 = sshll.u32 %s178, 4
          %s187 = int_to_ptr.vmem [resolvable:$true] %s186
          %189 = dma.hbm_to_vmem [thread:$0]  %s185, 48, %s187, %s175
        $region28: #{encoder_bilstm_forward.1} parent=19 // pred_fallthru
          _
      $region20: #{encoder_bilstm_forward.1} parent=5 // pred_fallthru
        _
      %p190 = scmp.le.s32.totalorder 1, %s15
      %p191 = scmp.lt.s32.totalorder %s15, 3
      %p192 = pnand %p190, %p191
      %p193 = pneg %p192
      // Predicated region
      $region29: #{encoder_bilstm_forward.1} parent=5 // pred_check
        _
      $region30: #{encoder_bilstm_forward.1} parent=5 // pred_check_branch
        %195 = sbr.rel (%p192) target = $region32
      $region31: #{encoder_bilstm_forward.1} parent=5 // pred_region
        %s196 = ssub.s32 %s15, 1
        // Predicated region
        $region33: #{encoder_bilstm_forward.1} parent=31 // pred_check
          %p197 = pneg %p43
        $region34: #{encoder_bilstm_forward.1} parent=31 // pred_check_branch
          %199 = sbr.rel (%p197) target = $region36
        $region35: #{encoder_bilstm_forward.1} parent=31 // pred_region
          %201 = dma.done [#allocation6], 16
        $region36: #{encoder_bilstm_forward.1} parent=31 // pred_fallthru
          _
        %s202 = sand.u32 %s20, 1
        %s203 = scalar_lea.sflag [#allocation8], %s202
        %s204 = sand.u32 %s56, 1
        %s205 = smul.addr %s204, 192
        %s206 = scalar_lea.vmem [#allocation7], %s205
        // Predicated region
        $region37: #{encoder_bilstm_forward.1} parent=31 // pred_check
          %p207 = pneg %p69
        $region38: #{encoder_bilstm_forward.1} parent=31 // pred_check_branch
          %209 = sbr.rel (%p207) target = $region40
        $region39: #{encoder_bilstm_forward.1} parent=31 // pred_region
          %211 = dma.done %s203, 3072
        $region40: #{encoder_bilstm_forward.1} parent=31 // pred_fallthru
          _
        %s212 = sand.u32 %s20, 1
        %s213 = scalar_lea.sflag [#allocation8], %s212
        %s214 = sand.u32 %s82, 1
        %s215 = smul.addr %s214, 3
        %s216 = scalar_lea.vmem [#allocation9], %s215
        // Predicated region
        $region41: #{encoder_bilstm_forward.1} parent=31 // pred_check
          %p217 = pneg %p95
        $region42: #{encoder_bilstm_forward.1} parent=31 // pred_check_branch
          %219 = sbr.rel (%p217) target = $region44
        $region43: #{encoder_bilstm_forward.1} parent=31 // pred_region
          %221 = dma.done %s213, 48
        $region44: #{encoder_bilstm_forward.1} parent=31 // pred_fallthru
          _
        %p222 = pneg %p43
        %p223 = pneg %p40
        %s224 = sand.u32 %s20, 1
        %s225 = scalar_lea.sflag [#allocation8], %s224
        %s226 = sand.u32 %s56, 1
        %s227 = smul.addr %s226, 192
        %s228 = scalar_lea.vmem [#allocation7], %s227
        %p229 = pneg %p69
        %p230 = pneg %p66
        %s231 = sand.u32 %s20, 1
        %s232 = scalar_lea.sflag [#allocation8], %s231
        %s233 = sand.u32 %s82, 1
        %s234 = smul.addr %s233, 3
        %s235 = scalar_lea.vmem [#allocation9], %s234
        %p236 = pneg %p95
        %p237 = pneg %p92
        %p238 = pneg %p116
        %p239 = pneg %p113
        %s240 = sld [smem:[#allocation4]]
        %p241 = scmp.eq.s32.totalorder %s20, 0
        // Predicated region
        $region45: #{encoder_bilstm_forward.1} parent=31 // pred_check
          %p242 = pneg %p241
        $region46: #{encoder_bilstm_forward.1} parent=31 // pred_check_branch
          %244 = sbr.rel (%p242) target = $region48
        $region47: #{encoder_bilstm_forward.1} parent=31 // pred_region
          %v245 = vld [vmem:[#allocation5] sm:$0x1]
          %246 = vst [vmem:[#allocation2] sm:$0x1] %v245
        $region48: #{encoder_bilstm_forward.1} parent=31 // pred_fallthru
          _
        %v247 = vld [vmem:[#allocation2] sm:$0x1]
        %v248 = vpack.c.bf16 %v247, %v247
        %v249 = vld [vmem:[%s206] sm:$0xff]
        %v250 = vld [vmem:[%s206 + $0x8] sm:$0xf]
        %v251 = vld [vmem:[%s206 + $0xc] sm:$0xff]
        %v252 = vld [vmem:[%s206 + $0x14] sm:$0xf]
        %v253 = vld [vmem:[%s206 + $0x18] sm:$0xff]
        %v254 = vld [vmem:[%s206 + $0x20] sm:$0xf]
        %v255 = vld [vmem:[%s206 + $0x24] sm:$0xff]
        %v256 = vld [vmem:[%s206 + $0x2c] sm:$0xf]
        %v257 = vld [vmem:[%s206 + $0x30] sm:$0xff]
        %v258 = vld [vmem:[%s206 + $0x38] sm:$0xf]
        %v259 = vld [vmem:[%s206 + $0x3c] sm:$0xff]
        %v260 = vld [vmem:[%s206 + $0x44] sm:$0xf]
        %v261 = vld [vmem:[%s206 + $0x48] sm:$0xff]
        %v262 = vld [vmem:[%s206 + $0x50] sm:$0xf]
        %v263 = vld [vmem:[%s206 + $0x54] sm:$0xff]
        %v264 = vld [vmem:[%s206 + $0x5c] sm:$0xf]
        %v265 = vld [vmem:[%s206 + $0x60] sm:$0xff]
        %v266 = vld [vmem:[%s206 + $0x68] sm:$0xf]
        %v267 = vld [vmem:[%s206 + $0x6c] sm:$0xff]
        %v268 = vld [vmem:[%s206 + $0x74] sm:$0xf]
        %v269 = vld [vmem:[%s206 + $0x78] sm:$0xff]
        %v270 = vld [vmem:[%s206 + $0x80] sm:$0xf]
        %v271 = vld [vmem:[%s206 + $0x84] sm:$0xff]
        %v272 = vld [vmem:[%s206 + $0x8c] sm:$0xf]
        %v273 = vld [vmem:[%s206 + $0x90] sm:$0xff]
        %v274 = vld [vmem:[%s206 + $0x98] sm:$0xf]
        %v275 = vld [vmem:[%s206 + $0x9c] sm:$0xff]
        %v276 = vld [vmem:[%s206 + $0xa4] sm:$0xf]
        %v277 = vld [vmem:[%s206 + $0xa8] sm:$0xff]
        %v278 = vld [vmem:[%s206 + $0xb0] sm:$0xf]
        %v279 = vld [vmem:[%s206 + $0xb4] sm:$0xff]
        %v280 = vld [vmem:[%s206 + $0xbc] sm:$0xf]
        %v281 = vld [vmem:[%s216] sm:$0x7]
        %v314 = vunpack.c.l.b16 %v249
        %v315 = vunpack.c.h.b16 %v249
        %v316 = vunpack.c.l.b16 %v250
        %v317 = vunpack.c.l.b16 %v251
        %v318 = vunpack.c.h.b16 %v251
        %v319 = vunpack.c.l.b16 %v252
        %v320 = vunpack.c.l.b16 %v253
        %v321 = vunpack.c.h.b16 %v253
        %v322 = vunpack.c.l.b16 %v254
        %v323 = vunpack.c.l.b16 %v255
        %v324 = vunpack.c.h.b16 %v255
        %v325 = vunpack.c.l.b16 %v256
        %v326 = vunpack.c.l.b16 %v257
        %v327 = vunpack.c.h.b16 %v257
        %v328 = vunpack.c.l.b16 %v258
        %v329 = vunpack.c.l.b16 %v259
        %v330 = vunpack.c.h.b16 %v259
        %v331 = vunpack.c.l.b16 %v260
        %v332 = vunpack.c.l.b16 %v261
        %v333 = vunpack.c.h.b16 %v261
        %v334 = vunpack.c.l.b16 %v262
        %v335 = vunpack.c.l.b16 %v263
        %v336 = vunpack.c.h.b16 %v263
        %v337 = vunpack.c.l.b16 %v264
        %v338 = vunpack.c.l.b16 %v265
        %v339 = vunpack.c.h.b16 %v265
        %v340 = vunpack.c.l.b16 %v266
        %v341 = vunpack.c.l.b16 %v267
        %v342 = vunpack.c.h.b16 %v267
        %v343 = vunpack.c.l.b16 %v268
        %v344 = vunpack.c.l.b16 %v269
        %v345 = vunpack.c.h.b16 %v269
        %v346 = vunpack.c.l.b16 %v270
        %v347 = vunpack.c.l.b16 %v271
        %v348 = vunpack.c.h.b16 %v271
        %v349 = vunpack.c.l.b16 %v272
        %v350 = vunpack.c.l.b16 %v273
        %v351 = vunpack.c.h.b16 %v273
        %v352 = vunpack.c.l.b16 %v274
        %v353 = vunpack.c.l.b16 %v275
        %v354 = vunpack.c.h.b16 %v275
        %v355 = vunpack.c.l.b16 %v276
        %v356 = vunpack.c.l.b16 %v277
        %v357 = vunpack.c.h.b16 %v277
        %v358 = vunpack.c.l.b16 %v278
        %v359 = vunpack.c.l.b16 %v279
        %v360 = vunpack.c.h.b16 %v279
        %v361 = vunpack.c.l.b16 %v280
        %v362 = vpack.c.b16 %v317, %v314
        %v363 = vpack.c.b16 %v318, %v315
        %v364 = vpack.c.b16 %v319, %v316
        %v365 = vpack.c.b16 %v323, %v320
        %v366 = vpack.c.b16 %v324, %v321
        %v367 = vpack.c.b16 %v325, %v322
        %v368 = vpack.c.b16 %v329, %v326
        %v369 = vpack.c.b16 %v330, %v327
        %v370 = vpack.c.b16 %v331, %v328
        %v371 = vpack.c.b16 %v335, %v332
        %v372 = vpack.c.b16 %v336, %v333
        %v373 = vpack.c.b16 %v337, %v334
        %v374 = vpack.c.b16 %v341, %v338
        %v375 = vpack.c.b16 %v342, %v339
        %v376 = vpack.c.b16 %v343, %v340
        %v377 = vpack.c.b16 %v347, %v344
        %v378 = vpack.c.b16 %v348, %v345
        %v379 = vpack.c.b16 %v349, %v346
        %v380 = vpack.c.b16 %v353, %v350
        %v381 = vpack.c.b16 %v354, %v351
        %v382 = vpack.c.b16 %v355, %v352
        %v383 = vpack.c.b16 %v359, %v356
        %v384 = vpack.c.b16 %v360, %v357
        %v385 = vpack.c.b16 %v361, %v358
        %v411 = vperm.slane %v281, 0
        %v412 = vperm.slane %v281, 1
        %v413 = vperm.slane %v281, 2
        %417 = vmatpush.bf16.msra.mxu0 %v383
        %418 = vmatpush.bf16.msra.mxu0 %v380
        %419 = vmatpush.bf16.msra.mxu0 %v377
        %420 = vmatpush.bf16.msra.mxu0 %v374
        %421 = vmatpush.bf16.msra.mxu0 %v371
        %422 = vmatpush.bf16.msra.mxu0 %v368
        %423 = vmatpush.bf16.msra.mxu0 %v365
        %424 = vmatpush.bf16.msra.mxu0 %v362
        %425 = vmatmul.bf16.gmra.mxu0 %v248
        %v426 = vpop.f32.mrf.mxu0
        %v427 = vadd.f32 %v411, %v426
        %v428 = vpop.f32.mrf.mxu0
        %429 = vdwg.mxu0
        %430 = vmatpush.bf16.msra.mxu0 %v384
        %431 = vmatpush.bf16.msra.mxu0 %v381
        %432 = vmatpush.bf16.msra.mxu0 %v378
        %433 = vmatpush.bf16.msra.mxu0 %v375
        %434 = vmatpush.bf16.msra.mxu0 %v372
        %435 = vmatpush.bf16.msra.mxu0 %v369
        %436 = vmatpush.bf16.msra.mxu0 %v366
        %437 = vmatpush.bf16.msra.mxu0 %v363
        %438 = vmatmul.bf16.gmra.mxu0 %v248
        %v439 = vpop.f32.mrf.mxu0
        %v440 = vadd.f32 %v412, %v439
        %v441 = vpop.f32.mrf.mxu0
        %442 = vdwg.mxu0
        %443 = vmatpush.bf16.msra.mxu0 %v385
        %444 = vmatpush.bf16.msra.mxu0 %v382
        %445 = vmatpush.bf16.msra.mxu0 %v379
        %446 = vmatpush.bf16.msra.mxu0 %v376
        %447 = vmatpush.bf16.msra.mxu0 %v373
        %448 = vmatpush.bf16.msra.mxu0 %v370
        %449 = vmatpush.bf16.msra.mxu0 %v367
        %450 = vmatpush.bf16.msra.mxu0 %v364
        %451 = vmatmul.bf16.gmra.mxu0 %v248
        %v452 = vpop.f32.mrf.mxu0
        %v453 = vadd.f32 %v413, %v452
        %v454 = vpop.f32.mrf.mxu0
        %455 = vdwg.mxu0
        %v456 = vxor.u32 %v427, 2147483648
        %v457 = vxor.u32 %v440, 2147483648
        %v458 = vmul.f32 %v456, 1.442695
        %v459 = vpow.pop %v458
        %v460 = vmul.f32 %v457, 1.442695
        %v461 = vpow.pop %v460
        %v462 = vadd.f32 %v459, 1.0
        %v463 = vadd.f32 %v461, 1.0
        %v464 = vrcp.pop %v462
        %v465 = vmul.f32 %v462, %v464
        %v466 = vsub.f32 1.0, %v465
        %v467 = vmul.f32 %v464, %v466
        %v468 = vadd.f32 %v464, %v467
        %vm469 = vweird.f32 %v462
        %vm470 = vweird.f32 %v464
        %vm471 = vmor %vm469, %vm470
        %v472 = vsel %vm471, %v464, %v468
        %v473 = vand.u32 2147483647, %v462
        %vm474 = vcmp.eq.f32.partialorder %v473, 8.507059e+37
        %v475 = vand.u32 %v462, 2147483648
        %v476 = vor.u32 1.1754944e-38, %v475
        %v477 = vsel %vm474, %v476, %v472
        %v478 = vmul.f32 1.0, %v477
        %v479 = vrcp.pop %v463
        %v480 = vmul.f32 %v463, %v479
        %v481 = vsub.f32 1.0, %v480
        %v482 = vmul.f32 %v479, %v481
        %v483 = vadd.f32 %v479, %v482
        %vm484 = vweird.f32 %v463
        %vm485 = vweird.f32 %v479
        %vm486 = vmor %vm484, %vm485
        %v487 = vsel %vm486, %v479, %v483
        %v488 = vand.u32 2147483647, %v463
        %vm489 = vcmp.eq.f32.partialorder %v488, 8.507059e+37
        %v490 = vand.u32 %v463, 2147483648
        %v491 = vor.u32 1.1754944e-38, %v490
        %v492 = vsel %vm489, %v491, %v487
        %v493 = vmul.f32 1.0, %v492
        %v494 = vtanh.pop %v453
        %v495 = vmul.f32 %v478, %v494
        %v496 = vtanh.pop %v495
        %v497 = vmul.f32 %v493, %v496
        %p498 = scmp.lt.s32.totalorder %s20, 1
        // Predicated region
        $region49: #{encoder_bilstm_forward.1} parent=31 // pred_check
          %p499 = pneg %p498
        $region50: #{encoder_bilstm_forward.1} parent=31 // pred_check_branch
          %501 = sbr.rel (%p499) target = $region52
        $region51: #{encoder_bilstm_forward.1} parent=31 // pred_region
          %502 = vst [vmem:[#allocation2] sm:$0x1] %v497
        $region52: #{encoder_bilstm_forward.1} parent=31 // pred_fallthru
          _
        %p503 = scmp.eq.s32.totalorder %s20, 1
        // Predicated region
        $region53: #{encoder_bilstm_forward.1} parent=31 // pred_check
          %p504 = pneg %p503
        $region54: #{encoder_bilstm_forward.1} parent=31 // pred_check_branch
          %506 = sbr.rel (%p504) target = $region56
        $region55: #{encoder_bilstm_forward.1} parent=31 // pred_region
          %507 = vst [vmem:[%s4] sm:$0x1] %v497
        $region56: #{encoder_bilstm_forward.1} parent=31 // pred_fallthru
          _
        // Predicated region
        $region57: #{encoder_bilstm_forward.1} parent=31 // pred_check
          %p508 = pneg %p113
        $region58: #{encoder_bilstm_forward.1} parent=31 // pred_check_branch
          %510 = sbr.rel (%p508) target = $region60
        $region59: #{encoder_bilstm_forward.1} parent=31 // pred_region
          _
        $region60: #{encoder_bilstm_forward.1} parent=31 // pred_fallthru
          _
        // Predicated region
        $region61: #{encoder_bilstm_forward.1} parent=31 // pred_check
          %p511 = pneg %p113
        $region62: #{encoder_bilstm_forward.1} parent=31 // pred_check_branch
          %513 = sbr.rel (%p511) target = $region64
        $region63: #{encoder_bilstm_forward.1} parent=31 // pred_region
          _
        $region64: #{encoder_bilstm_forward.1} parent=31 // pred_fallthru
          _
      $region32: #{encoder_bilstm_forward.1} parent=5 // pred_fallthru
        _
      %p514 = scmp.le.s32.totalorder 2, %s15
      // Predicated region
      $region65: #{encoder_bilstm_forward.1} parent=5 // pred_check
        %p515 = pneg %p514
      $region66: #{encoder_bilstm_forward.1} parent=5 // pred_check_branch
        %517 = sbr.rel (%p515) target = $region68
      $region67: #{encoder_bilstm_forward.1} parent=5 // pred_region
        %s518 = ssub.s32 %s15, 2
      $region68: #{encoder_bilstm_forward.1} parent=5 // pred_fallthru
        _
    $region6: #{encoder_bilstm_forward.1} parent=1 // loop_footer
      %s19 = sadd.s32 1, %s15
    $region7: #{encoder_bilstm_forward.1} parent=1 // loop_footer_branch
      %14 = sbr.rel target = $region3
    $region8: #{encoder_bilstm_forward.1} parent=1 // loop_exit
      _
    %519 = vsyncpa [#allocation6], 1
    %s520 = scalar_lea.sflag [#allocation6], 1
    %521 = vsyncpa %s520, 1
    %522 = vsyncpa [#allocation8], 1
    %s523 = scalar_lea.sflag [#allocation8], 1
    %524 = vsyncpa %s523, 1

</llo_original>
